<compile_context>
chip_gen: v7x
topology: tpu7x:2x2x1
jax: 0.10.0
libtpu: 0.0.40
codegen_flags: <defaults>
</compile_context>

<pallas_src>
import functools
import math

import jax
import jax.numpy as jnp
from jax.experimental import pallas as pl
from jax.experimental.pallas import tpu as pltpu


def _lstm_recurrent_kernel(pre_ref, h0_ref, c0_ref, whh_ref, scl_ref, off_ref,
                           hs_ref, hN_ref, cN_ref,
                           h_scr, c_scr, *, hidden, steps_per_block):
    """One grid step == `steps_per_block` LSTMCell timesteps.

    pre_ref : (TT, B, 4H) f32  precomputed x_t @ W_ih^T + bias (gate-scaled)
    whh_ref : (H, 4H)          gate-scaled W_hh^T, VMEM resident (const index)
    scl/off : (1, 4H) f32      per-lane affine turning one tanh into the gates
    State (h, c) is carried across grid steps in VMEM scratch.
    """
    blk = pl.program_id(0)
    H = hidden
    B = h0_ref.shape[0]
    four_h = scl_ref.shape[-1]

    # Initialize the carried state from (h0, c0) on the first time block.
    @pl.when(blk == 0)
    def _init():
        h_scr[...] = h0_ref[...].astype(jnp.float32)
        c_scr[...] = c0_ref[...].astype(jnp.float32)

    w = whh_ref[...]                                   # (H, 4H), resident
    # Hoisted broadcasts (JAX does not CSE broadcast_in_dim inside the loop).
    scale = jnp.broadcast_to(scl_ref[...], (B, four_h))
    offset = jnp.broadcast_to(off_ref[...], (B, four_h))

    def step(k, carry):
        h, c = carry                                   # (B, H) f32 each
        # Recurrent matmul only; the input projection was hoisted outside.
        gates = pre_ref[k] + jnp.dot(h.astype(w.dtype), w,
                                     preferred_element_type=jnp.float32)
        # i/f/o = sigmoid, g = tanh -- ONE EUP tanh over the whole (B, 4H)
        # vreg; the 0.5 pre-scaling of the i/f/o columns was folded into the
        # weights/bias at init, so only an affine remains here.
        act = scale * jnp.tanh(gates) + offset
        i_g = act[:, 0 * H:1 * H]
        f_g = act[:, 1 * H:2 * H]
        g_g = act[:, 2 * H:3 * H]
        o_g = act[:, 3 * H:4 * H]
        c_new = f_g * c + i_g * g_g
        h_new = o_g * jnp.tanh(c_new)
        hs_ref[k] = h_new.astype(hs_ref.dtype)         # per-step hidden output
        return h_new, c_new

    h, c = jax.lax.fori_loop(0, steps_per_block, step,
                             (h_scr[...], c_scr[...]), unroll=True)

    # Carry state to the next time block.
    h_scr[...] = h
    c_scr[...] = c

    # Final state: written (and DMA'd back) only once, after the last block.
    @pl.when(blk == pl.num_programs(0) - 1)
    def _final():
        hN_ref[...] = h.astype(hN_ref.dtype)
        cN_ref[...] = c.astype(cN_ref.dtype)


def _lstm_recurrence(pre_gates, h0, c0, w_hh_t, act_scale, act_offset,
                     *, steps_per_block):
    """Pallas call running the time recurrence over precomputed pre_gates."""
    T, B, four_h = pre_gates.shape
    H = h0.shape[1]
    TT = steps_per_block
    n_blocks = T // TT

    kernel = functools.partial(_lstm_recurrent_kernel, hidden=H,
                               steps_per_block=TT)

    # Explicit scoped-VMEM budget: resident W_hh^T + double-buffered
    # pre/hs blocks + state scratch (matters once H / TT grow past toy sizes).
    elt = 4  # f32 bytes for pipelined blocks / scratch
    vmem_bytes = int(
        2 * w_hh_t.size * w_hh_t.dtype.itemsize     # resident W_hh^T
        + 2 * 2 * TT * B * four_h * elt             # pre blocks (double-buf)
        + 2 * 2 * TT * B * H * elt                  # hs blocks (double-buf)
        + 16 * B * H * elt                          # h0/c0/h_T/c_T + scratch
        + 8 * four_h * elt                          # scale / offset
        + (1 << 20))                                # slack
    vmem_bytes = min(max(vmem_bytes, 16 * 1024 * 1024), 60 * 1024 * 1024)

    hs, h_n, c_n = pl.pallas_call(
        kernel,
        out_shape=(
            jax.ShapeDtypeStruct((T, B, H), jnp.float32),
            jax.ShapeDtypeStruct((B, H), jnp.float32),
            jax.ShapeDtypeStruct((B, H), jnp.float32),
        ),
        grid=(n_blocks,),
        in_specs=[
            pl.BlockSpec((TT, B, four_h), lambda t: (t, 0, 0)),   # pre_gates
            pl.BlockSpec((B, H), lambda t: (0, 0)),               # h0
            pl.BlockSpec((B, H), lambda t: (0, 0)),               # c0
            pl.BlockSpec((H, four_h), lambda t: (0, 0)),          # W_hh^T (resident)
            pl.BlockSpec((1, four_h), lambda t: (0, 0)),          # act scale
            pl.BlockSpec((1, four_h), lambda t: (0, 0)),          # act offset
        ],
        out_specs=(
            pl.BlockSpec((TT, B, H), lambda t: (t, 0, 0)),        # hs slab
            pl.BlockSpec((B, H), lambda t: (0, 0)),               # h_T
            pl.BlockSpec((B, H), lambda t: (0, 0)),               # c_T
        ),
        scratch_shapes=[
            pltpu.VMEM((B, H), jnp.float32),   # h carry
            pltpu.VMEM((B, H), jnp.float32),   # c carry
        ],
        compiler_params=pltpu.CompilerParams(
            dimension_semantics=("arbitrary",),   # time recurrence
            vmem_limit_bytes=vmem_bytes,
        ),
    )(pre_gates, h0, c0, w_hh_t, act_scale, act_offset)
    return hs, h_n, c_n


@functools.partial(jax.jit, static_argnames=("steps_per_block",))
def _lstm_forward(xs, h0, c0, w_ih_t, w_hh_t, bias, act_scale, act_offset,
                  *, steps_per_block):
    T, B, in_size = xs.shape
    H = h0.shape[1]
    # Hoisted input projection: ONE (T*B, in) x (in, 4H) MXU-efficient matmul
    # for the whole sequence (plain XLA, per the review), so the recurrent
    # Pallas kernel only does h @ W_hh^T + pre_gates[t] per step.
    pre = jnp.dot(xs.reshape(T * B, in_size).astype(w_ih_t.dtype), w_ih_t,
                  preferred_element_type=jnp.float32) + bias
    pre = pre.reshape(T, B, 4 * H)
    return _lstm_recurrence(pre, h0.astype(jnp.float32),
                            c0.astype(jnp.float32), w_hh_t,
                            act_scale, act_offset,
                            steps_per_block=steps_per_block)


def lstm_sequence(xs, h0, c0, w_ih_t, w_hh_t, bias, act_scale, act_offset,
                  steps_per_block=8):
    """Run T LSTMCell timesteps (one pallas_call).  Returns (hs, h_T, c_T)."""
    T = xs.shape[0]
    # Time axis is blocked by `steps_per_block`; pick the largest divisor of T
    # that does not exceed the request (never zero-pad the time axis -- that
    # would corrupt the carried state).
    tt = max(d for d in range(1, min(steps_per_block, T) + 1) if T % d == 0)
    return _lstm_forward(xs, h0, c0, w_ih_t, w_hh_t, bias, act_scale,
                         act_offset, steps_per_block=tt)


class RNNPallas:
    """JAX/Pallas analogue of the PyTorch RNN module (stateful LSTMCell)."""

    def __init__(self, input_size, output_size, batch_size=1, *, key,
                 param_dtype=jnp.float32):
        self.output_size = output_size
        H = output_size
        k = 1.0 / math.sqrt(H)
        keys = jax.random.split(key, 6)
        # nn.LSTMCell init: uniform(-1/sqrt(hidden), 1/sqrt(hidden))
        self.w_ih = jax.random.uniform(keys[0], (4 * H, input_size),
                                       jnp.float32, -k, k)
        self.w_hh = jax.random.uniform(keys[1], (4 * H, H),
                                       jnp.float32, -k, k)
        self.b_ih = jax.random.uniform(keys[2], (4 * H,), jnp.float32, -k, k)
        self.b_hh = jax.random.uniform(keys[3], (4 * H,), jnp.float32, -k, k)
        # self.hx = torch.randn(batch_size, output_size), same for cx
        self.hx = jax.random.normal(keys[4], (batch_size, H), jnp.float32)
        self.cx = jax.random.normal(keys[5], (batch_size, H), jnp.float32)

        # --- One-time preprocessing (hoisted out of the kernel) -------------
        # sigmoid(z) = 0.5*tanh(0.5*z) + 0.5 (exact): pre-scale the i/f/o gate
        # columns (PyTorch gate order [i|f|g|o]) and bias by 0.5, and keep
        # resident per-lane (scale, offset) vectors so the kernel applies a
        # single tanh over the whole (B, 4H) vreg followed by one affine.
        half = jnp.full((H,), 0.5, jnp.float32)
        one = jnp.ones((H,), jnp.float32)
        zero = jnp.zeros((H,), jnp.float32)
        gate_col_scale = jnp.concatenate([half, half, one, half])        # (4H,)
        self.act_scale = gate_col_scale.reshape(1, 4 * H)                # (1,4H)
        self.act_offset = jnp.concatenate([half, half, zero, half]
                                          ).reshape(1, 4 * H)            # (1,4H)
        # Transposed, gate-scaled weights. param_dtype=jnp.bfloat16 halves the
        # weight/activation DMA bytes (f32 accumulation + f32 gate math are
        # kept inside the kernel); default f32 for strict correctness below.
        self.w_ih_t = (jnp.transpose(self.w_ih)
                       * gate_col_scale[None, :]).astype(param_dtype)    # (in,4H)
        self.w_hh_t = (jnp.transpose(self.w_hh)
                       * gate_col_scale[None, :]).astype(param_dtype)    # (H,4H)
        self.bias = ((self.b_ih + self.b_hh) * gate_col_scale
                     ).reshape(1, 4 * H).astype(jnp.float32)             # (1,4H)

    def forward(self, x):
        """Single timestep; same semantics as the PyTorch module's forward."""
        _, h_n, c_n = lstm_sequence(x[None], self.hx, self.cx, self.w_ih_t,
                                    self.w_hh_t, self.bias, self.act_scale,
                                    self.act_offset)
        self.hx, self.cx = h_n, c_n
        return self.hx

    __call__ = forward

    def forward_sequence(self, xs, steps_per_block=8):
        """Process a whole (T, B, input_size) sequence in one kernel launch."""
        hs, h_n, c_n = lstm_sequence(xs, self.hx, self.cx, self.w_ih_t,
                                     self.w_hh_t, self.bias, self.act_scale,
                                     self.act_offset,
                                     steps_per_block=steps_per_block)
        self.hx, self.cx = h_n, c_n
        return hs


def _reference_lstm_step(x, hx, cx, w_ih, w_hh, b_ih, b_hh):
    gates = x @ w_ih.T + b_ih + hx @ w_hh.T + b_hh
    H = hx.shape[1]
    i = jax.nn.sigmoid(gates[:, :H])
    f = jax.nn.sigmoid(gates[:, H:2 * H])
    g = jnp.tanh(gates[:, 2 * H:3 * H])
    o = jax.nn.sigmoid(gates[:, 3 * H:])
    c_new = f * cx + i * g
    h_new = o * jnp.tanh(c_new)
    return h_new, c_new


if __name__ == "__main__":
    key = jax.random.PRNGKey(0)
    k_model, k_input = jax.random.split(key)

    batch_size = 8     # fills all 8 sublanes (perf review)
    input_size = 16
    output_size = 32   # hidden size; 4H = 128 -> lane-dense gate vreg
    seq_len = 16       # blocked as 2 grid steps x 8 timesteps

    model = RNNPallas(input_size, output_size, batch_size=batch_size,
                      key=k_model)

    xs = jax.random.normal(k_input, (seq_len, batch_size, input_size),
                           jnp.float32)

    # Pure-JAX reference, step by step from the initial state.
    h0, c0 = model.hx, model.cx
    h_r, c_r = h0, c0
    hs_ref, cs_ref = [], []
    for t in range(seq_len):
        h_r, c_r = _reference_lstm_step(xs[t], h_r, c_r, model.w_ih,
                                        model.w_hh, model.b_ih, model.b_hh)
        hs_ref.append(h_r)
        cs_ref.append(c_r)
    hs_ref = jnp.stack(hs_ref)

    # 1) Single-step forward (exact semantics of the PyTorch module.forward).
    h1 = model(xs[0])
    jax.block_until_ready(h1)
    assert h1.shape == (batch_size, output_size)
    assert jnp.allclose(h1, hs_ref[0], atol=1e-4, rtol=1e-4)
    assert jnp.allclose(model.cx, cs_ref[0], atol=1e-4, rtol=1e-4)

    # 2) Whole-sequence forward: blocked time loop inside one pallas_call.
    model.hx, model.cx = h0, c0            # reset state (like RNN.reset())
    hs = model.forward_sequence(xs, steps_per_block=8)
    jax.block_until_ready(hs)
    assert hs.shape == (seq_len, batch_size, output_size)
    assert jnp.allclose(hs, hs_ref, atol=1e-4, rtol=1e-4)
    assert jnp.allclose(model.hx, hs_ref[-1], atol=1e-4, rtol=1e-4)
    assert jnp.allclose(model.cx, cs_ref[-1], atol=1e-4, rtol=1e-4)

    print("KERNEL_OK")
</pallas_src>

<mosaic_0001>
module attributes {stable_mosaic.version = 11 : i64} {
  func.func @_lstm_recurrent_kernel(%arg0: i32, %arg1: memref<1x8x128xf32, #tpu.memory_space<vmem>>, %arg2: memref<8x32xf32, #tpu.memory_space<vmem>>, %arg3: memref<8x32xf32, #tpu.memory_space<vmem>>, %arg4: memref<32x128xf32, #tpu.memory_space<vmem>>, %arg5: memref<1x128xf32, #tpu.memory_space<vmem>>, %arg6: memref<1x128xf32, #tpu.memory_space<vmem>>, %arg7: memref<1x8x32xf32, #tpu.memory_space<vmem>>, %arg8: memref<8x32xf32, #tpu.memory_space<vmem>>, %arg9: memref<8x32xf32, #tpu.memory_space<vmem>>, %arg10: memref<8x32xf32, #tpu.memory_space<vmem>>, %arg11: memref<8x32xf32, #tpu.memory_space<vmem>>) attributes {dimension_semantics = [#tpu.dimension_semantics<arbitrary>], iteration_bounds = array<i64: 1>, scalar_prefetch = 0 : i64, scratch_operands = 2 : i64, tpu.core_type = #tpu.core_type<tc>, window_params = [{transform_indices = @transform_0, window_bounds = array<i64: 1, 8, 128>}, {pipeline_mode = #tpu.pipeline_mode<synchronous>, transform_indices = @transform_1, window_bounds = array<i64: 8, 32>}, {pipeline_mode = #tpu.pipeline_mode<synchronous>, transform_indices = @transform_2, window_bounds = array<i64: 8, 32>}, {pipeline_mode = #tpu.pipeline_mode<synchronous>, transform_indices = @transform_3, window_bounds = array<i64: 32, 128>}, {pipeline_mode = #tpu.pipeline_mode<synchronous>, transform_indices = @transform_4, window_bounds = array<i64: 1, 128>}, {pipeline_mode = #tpu.pipeline_mode<synchronous>, transform_indices = @transform_5, window_bounds = array<i64: 1, 128>}, {transform_indices = @transform_6, window_bounds = array<i64: 1, 8, 32>}, {pipeline_mode = #tpu.pipeline_mode<synchronous>, transform_indices = @transform_7, window_bounds = array<i64: 8, 32>}, {pipeline_mode = #tpu.pipeline_mode<synchronous>, transform_indices = @transform_8, window_bounds = array<i64: 8, 32>}]} {
    %c0_i32 = arith.constant 0 : i32
    %0 = arith.cmpi eq, %arg0, %c0_i32 : i32
    %1 = arith.extui %0 : i1 to i32
    %c0_i32_0 = arith.constant 0 : i32
    %2 = arith.cmpi ne, %1, %c0_i32_0 : i32
    scf.if %2 {
      %c0_21 = arith.constant 0 : index
      %c0_22 = arith.constant 0 : index
      %38 = vector.load %arg2[%c0_21, %c0_22] : memref<8x32xf32, #tpu.memory_space<vmem>>, vector<8x32xf32>
      %c0_23 = arith.constant 0 : index
      %c0_24 = arith.constant 0 : index
      %39 = vector.load %arg10[%c0_23, %c0_24] : memref<8x32xf32, #tpu.memory_space<vmem>>, vector<8x32xf32>
      tpu.vector_store %arg10[%c0_23, %c0_24], %38 {strides = array<i32>} : memref<8x32xf32, #tpu.memory_space<vmem>>, vector<8x32xf32>,
      %c0_25 = arith.constant 0 : index
      %c0_26 = arith.constant 0 : index
      %40 = vector.load %arg3[%c0_25, %c0_26] : memref<8x32xf32, #tpu.memory_space<vmem>>, vector<8x32xf32>
      %c0_27 = arith.constant 0 : index
      %c0_28 = arith.constant 0 : index
      %41 = vector.load %arg11[%c0_27, %c0_28] : memref<8x32xf32, #tpu.memory_space<vmem>>, vector<8x32xf32>
      tpu.vector_store %arg11[%c0_27, %c0_28], %40 {strides = array<i32>} : memref<8x32xf32, #tpu.memory_space<vmem>>, vector<8x32xf32>,
    } else {
    }
    %c0 = arith.constant 0 : index
    %c0_1 = arith.constant 0 : index
    %3 = vector.load %arg4[%c0, %c0_1] : memref<32x128xf32, #tpu.memory_space<vmem>>, vector<32x128xf32>
    %c0_2 = arith.constant 0 : index
    %c0_3 = arith.constant 0 : index
    %4 = vector.load %arg5[%c0_2, %c0_3] : memref<1x128xf32, #tpu.memory_space<vmem>>, vector<1x128xf32>
    %5 = vector.shape_cast %4 : vector<1x128xf32> to vector<1x128xf32>
    %6 = vector.broadcast %5 : vector<1x128xf32> to vector<8x128xf32>
    %c0_4 = arith.constant 0 : index
    %c0_5 = arith.constant 0 : index
    %7 = vector.load %arg6[%c0_4, %c0_5] : memref<1x128xf32, #tpu.memory_space<vmem>>, vector<1x128xf32>
    %8 = vector.shape_cast %7 : vector<1x128xf32> to vector<1x128xf32>
    %9 = vector.broadcast %8 : vector<1x128xf32> to vector<8x128xf32>
    %c0_6 = arith.constant 0 : index
    %c0_7 = arith.constant 0 : index
    %10 = vector.load %arg10[%c0_6, %c0_7] : memref<8x32xf32, #tpu.memory_space<vmem>>, vector<8x32xf32>
    %c0_8 = arith.constant 0 : index
    %c0_9 = arith.constant 0 : index
    %11 = vector.load %arg11[%c0_8, %c0_9] : memref<8x32xf32, #tpu.memory_space<vmem>>, vector<8x32xf32>
    %c0_i32_10 = arith.constant 0 : i32
    %12 = arith.index_cast %c0_i32_10 : i32 to index
    %c0_11 = arith.constant 0 : index
    %c0_12 = arith.constant 0 : index
    %13 = vector.load %arg1[%12, %c0_11, %c0_12] : memref<1x8x128xf32, #tpu.memory_space<vmem>>, vector<1x8x128xf32>
    %14 = vector.shape_cast %13 : vector<1x8x128xf32> to vector<8x128xf32>
    %cst = arith.constant dense<0.000000e+00> : vector<8x128xf32>
    %15 = tpu.matmul %10, %3, %cst {dimension_numbers = #tpu.dot_dimension_numbers<[1], [0], [0], [1], [0, 0, 1, 1], [], []>} : vector<8x32xf32>, vector<32x128xf32>, vector<8x128xf32> -> vector<8x128xf32>
    %16 = arith.addf %14, %15 : vector<8x128xf32>
    %17 = math.tanh %16 : vector<8x128xf32>
    %18 = arith.mulf %6, %17 : vector<8x128xf32>
    %19 = arith.addf %18, %9 : vector<8x128xf32>
    %20 = vector.extract_strided_slice %19 {offsets = [0, 0], sizes = [8, 32], strides = [1, 1]} : vector<8x128xf32> to vector<8x32xf32>
    %21 = vector.extract_strided_slice %19 {offsets = [0, 32], sizes = [8, 32], strides = [1, 1]} : vector<8x128xf32> to vector<8x32xf32>
    %22 = vector.extract_strided_slice %19 {offsets = [0, 64], sizes = [8, 32], strides = [1, 1]} : vector<8x128xf32> to vector<8x32xf32>
    %23 = vector.extract_strided_slice %19 {offsets = [0, 96], sizes = [8, 32], strides = [1, 1]} : vector<8x128xf32> to vector<8x32xf32>
    %24 = arith.mulf %21, %11 : vector<8x32xf32>
    %25 = arith.mulf %20, %22 : vector<8x32xf32>
    %26 = arith.addf %24, %25 : vector<8x32xf32>
    %27 = math.tanh %26 : vector<8x32xf32>
    %28 = arith.mulf %23, %27 : vector<8x32xf32>
    %29 = arith.index_cast %c0_i32_10 : i32 to index
    %c0_13 = arith.constant 0 : index
    %c0_14 = arith.constant 0 : index
    %30 = vector.load %arg7[%29, %c0_13, %c0_14] : memref<1x8x32xf32, #tpu.memory_space<vmem>>, vector<1x8x32xf32>
    %31 = vector.shape_cast %30 : vector<1x8x32xf32> to vector<8x32xf32>
    %32 = vector.shape_cast %28 : vector<8x32xf32> to vector<1x8x32xf32>
    tpu.vector_store %arg7[%29, %c0_13, %c0_14], %32 {strides = array<i32>} : memref<1x8x32xf32, #tpu.memory_space<vmem>>, vector<1x8x32xf32>,
    %c1_i32 = arith.constant 1 : i32
    %c0_15 = arith.constant 0 : index
    %c0_16 = arith.constant 0 : index
    %33 = vector.load %arg10[%c0_15, %c0_16] : memref<8x32xf32, #tpu.memory_space<vmem>>, vector<8x32xf32>
    tpu.vector_store %arg10[%c0_15, %c0_16], %28 {strides = array<i32>} : memref<8x32xf32, #tpu.memory_space<vmem>>, vector<8x32xf32>,
    %c0_17 = arith.constant 0 : index
    %c0_18 = arith.constant 0 : index
    %34 = vector.load %arg11[%c0_17, %c0_18] : memref<8x32xf32, #tpu.memory_space<vmem>>, vector<8x32xf32>
    tpu.vector_store %arg11[%c0_17, %c0_18], %26 {strides = array<i32>} : memref<8x32xf32, #tpu.memory_space<vmem>>, vector<8x32xf32>,
    %c0_i32_19 = arith.constant 0 : i32
    %35 = arith.cmpi eq, %arg0, %c0_i32_19 : i32
    %36 = arith.extui %35 : i1 to i32
    %c0_i32_20 = arith.constant 0 : i32
    %37 = arith.cmpi ne, %36, %c0_i32_20 : i32
    scf.if %37 {
      %c0_21 = arith.constant 0 : index
      %c0_22 = arith.constant 0 : index
      %38 = vector.load %arg8[%c0_21, %c0_22] : memref<8x32xf32, #tpu.memory_space<vmem>>, vector<8x32xf32>
      tpu.vector_store %arg8[%c0_21, %c0_22], %28 {strides = array<i32>} : memref<8x32xf32, #tpu.memory_space<vmem>>, vector<8x32xf32>,
      %c0_23 = arith.constant 0 : index
      %c0_24 = arith.constant 0 : index
      %39 = vector.load %arg9[%c0_23, %c0_24] : memref<8x32xf32, #tpu.memory_space<vmem>>, vector<8x32xf32>
      tpu.vector_store %arg9[%c0_23, %c0_24], %26 {strides = array<i32>} : memref<8x32xf32, #tpu.memory_space<vmem>>, vector<8x32xf32>,
    } else {
    }
    return
  }
  func.func @transform_0(%arg0: i32) -> (i32, i32, i32) {
    %c0_i32 = arith.constant 0 : i32
    %c0_i32_0 = arith.constant 0 : i32
    %c0_i32_1 = arith.constant 0 : i32
    return %arg0, %c0_i32, %c0_i32_0 : i32, i32, i32
  }
  func.func @transform_1(%arg0: i32) -> (i32, i32) {
    %c0_i32 = arith.constant 0 : i32
    %c0_i32_0 = arith.constant 0 : i32
    %c0_i32_1 = arith.constant 0 : i32
    return %c0_i32, %c0_i32_0 : i32, i32
  }
  func.func @transform_2(%arg0: i32) -> (i32, i32) {
    %c0_i32 = arith.constant 0 : i32
    %c0_i32_0 = arith.constant 0 : i32
    %c0_i32_1 = arith.constant 0 : i32
    return %c0_i32, %c0_i32_0 : i32, i32
  }
  func.func @transform_3(%arg0: i32) -> (i32, i32) {
    %c0_i32 = arith.constant 0 : i32
    %c0_i32_0 = arith.constant 0 : i32
    %c0_i32_1 = arith.constant 0 : i32
    return %c0_i32, %c0_i32_0 : i32, i32
  }
  func.func @transform_4(%arg0: i32) -> (i32, i32) {
    %c0_i32 = arith.constant 0 : i32
    %c0_i32_0 = arith.constant 0 : i32
    %c0_i32_1 = arith.constant 0 : i32
    return %c0_i32, %c0_i32_0 : i32, i32
  }
  func.func @transform_5(%arg0: i32) -> (i32, i32) {
    %c0_i32 = arith.constant 0 : i32
    %c0_i32_0 = arith.constant 0 : i32
    %c0_i32_1 = arith.constant 0 : i32
    return %c0_i32, %c0_i32_0 : i32, i32
  }
  func.func @transform_6(%arg0: i32) -> (i32, i32, i32) {
    %c0_i32 = arith.constant 0 : i32
    %c0_i32_0 = arith.constant 0 : i32
    %c0_i32_1 = arith.constant 0 : i32
    return %arg0, %c0_i32, %c0_i32_0 : i32, i32, i32
  }
  func.func @transform_7(%arg0: i32) -> (i32, i32) {
    %c0_i32 = arith.constant 0 : i32
    %c0_i32_0 = arith.constant 0 : i32
    %c0_i32_1 = arith.constant 0 : i32
    return %c0_i32, %c0_i32_0 : i32, i32
  }
  func.func @transform_8(%arg0: i32) -> (i32, i32) {
    %c0_i32 = arith.constant 0 : i32
    %c0_i32_0 = arith.constant 0 : i32
    %c0_i32_1 = arith.constant 0 : i32
    return %c0_i32, %c0_i32_0 : i32, i32
  }
}

</mosaic_0001>

<llo_original>
// kernel: _lstm_forward.1
$region0: #{_lstm_forward.1}
  #allocation0 [shape = 'u32[]', space=smem, size = 0x4, offset = 0x4, fixed_abs, tag = 'smem constant byte address 0x4 - core index']
  #allocation1 [shape = 'u32[144,128]{1,0:T(1,128)}', space=vmem, size = 0x12000, scoped, tag = 'internal scratch']
  #allocation2 [shape = 'f32[8,32]{1,0:T(8,128)}', space=vmem, size = 0x1000, scoped, tag = 'scratch operand']
  #allocation3 [shape = 'f32[8,32]{1,0:T(8,128)}', space=vmem, size = 0x1000, scoped, tag = 'scratch operand']
  %s0 = inlined_call_operand.vmem [shape: f32[1,8,128], index: 0, kind: input, shape index: {}]
  %s1 = inlined_call_operand.vmem [shape: f32[8,32], index: 1, kind: input, shape index: {}]
  %s2 = inlined_call_operand.vmem [shape: f32[8,32], index: 2, kind: input, shape index: {}]
  %s3 = inlined_call_operand.vmem [shape: f32[32,128], index: 3, kind: input, shape index: {}]
  %s4 = inlined_call_operand.vmem [shape: f32[1,128], index: 4, kind: input, shape index: {}]
  %s5 = inlined_call_operand.vmem [shape: f32[1,128], index: 5, kind: input, shape index: {}]
  %s6 = inlined_call_operand.hbm [shape: f32[1,8,32], index: 6, kind: output, shape index: {0}]
  %s7 = inlined_call_operand.hbm [shape: f32[8,32], index: 7, kind: output, shape index: {1}]
  %s8 = inlined_call_operand.hbm [shape: f32[8,32], index: 8, kind: output, shape index: {2}]
  %9 = xla_tuple %s6, %s7, %s8
  %s10 = sld [smem:[#allocation0]]
  $region58: #{_lstm_forward.1} parent=0
    _
  %s12 = ssub.s32 1, %s10
  %s13 = scalar_select 0, %s12, %s10
  $region1: #{_lstm_forward.1} parent=0
    #allocation4 [shape = 'u8[4096]{0}', space=vmem, size = 0x1000, scoped, tag = 'output window, operand 0, single buffered']
    #allocation5 [shape = 's32[1]{0}', space=sflag, size = 0x4, scoped, tag = 'scoped memory for _lstm_forward.1']
    #allocation6 [shape = 'u8[4096]{0}', space=vmem, size = 0x1000, scoped, tag = 'output window, operand 1, single buffered']
    #allocation7 [shape = 's32[1]{0}', space=sflag, size = 0x4, scoped, tag = 'scoped memory for _lstm_forward.1']
    #allocation8 [shape = 'u8[4096]{0}', space=vmem, size = 0x1000, scoped, tag = 'output window, operand 2, single buffered']
    %14 = vsyncpa [#allocation5], 0
    %15 = vsyncpa [#allocation7], 0
    // Predicated region
    $region2: #{_lstm_forward.1} parent=1 // pred_check
      _
    $region3: #{_lstm_forward.1} parent=1 // pred_check_branch
      %17 = sbr.rel (0) target = $region5
    $region4: #{_lstm_forward.1} parent=1 // pred_region
      _
    $region5: #{_lstm_forward.1} parent=1 // pred_fallthru
      _
    // Predicated region
    $region6: #{_lstm_forward.1} parent=1 // pred_check
      _
    $region7: #{_lstm_forward.1} parent=1 // pred_check_branch
      %19 = sbr.rel (0) target = $region9
    $region8: #{_lstm_forward.1} parent=1 // pred_region
      _
    $region9: #{_lstm_forward.1} parent=1 // pred_fallthru
      _
    // Predicated region
    $region10: #{_lstm_forward.1} parent=1 // pred_check
      _
    $region11: #{_lstm_forward.1} parent=1 // pred_check_branch
      %21 = sbr.rel (0) target = $region13
    $region12: #{_lstm_forward.1} parent=1 // pred_region
      _
    $region13: #{_lstm_forward.1} parent=1 // pred_fallthru
      _
    // Predicated region
    $region14: #{_lstm_forward.1} parent=1 // pred_check
      _
    $region15: #{_lstm_forward.1} parent=1 // pred_check_branch
      %23 = sbr.rel (0) target = $region17
    $region16: #{_lstm_forward.1} parent=1 // pred_region
      _
    $region17: #{_lstm_forward.1} parent=1 // pred_fallthru
      _
    // Predicated region
    $region18: #{_lstm_forward.1} parent=1 // pred_check
      _
    $region19: #{_lstm_forward.1} parent=1 // pred_check_branch
      %25 = sbr.rel (0) target = $region21
    $region20: #{_lstm_forward.1} parent=1 // pred_region
      _
    $region21: #{_lstm_forward.1} parent=1 // pred_fallthru
      _
    // Predicated region
    $region22: #{_lstm_forward.1} parent=1 // pred_check
      _
    $region23: #{_lstm_forward.1} parent=1 // pred_check_branch
      %27 = sbr.rel (0) target = $region25
    $region24: #{_lstm_forward.1} parent=1 // pred_region
      _
    $region25: #{_lstm_forward.1} parent=1 // pred_fallthru
      _
    %p28 = scmp.eq.s32.totalorder 0, 0
    // Predicated region
    $region26: #{_lstm_forward.1} parent=1 // pred_check
      %p29 = pneg %p28
    $region27: #{_lstm_forward.1} parent=1 // pred_check_branch
      %31 = sbr.rel (%p29) target = $region29
    $region28: #{_lstm_forward.1} parent=1 // pred_region
      %v32 = vld [vmem:[%s1] sm:$0xff]
      %vm33 = vcmask 261120
      %34 = vst.msk [vmem:[#allocation2] sm:$0xff] %vm33, %v32
      %v35 = vld [vmem:[%s2] sm:$0xff]
      %36 = vst.msk [vmem:[#allocation3] sm:$0xff] %vm33, %v35
    $region29: #{_lstm_forward.1} parent=1 // pred_fallthru
      _
    %v37 = vld [vmem:[%s3] sm:$0xff]
    %v38 = vld [vmem:[%s3 + $0x8] sm:$0xff]
    %v39 = vld [vmem:[%s3 + $0x10] sm:$0xff]
    %v40 = vld [vmem:[%s3 + $0x18] sm:$0xff]
    %v41 = vld [vmem:[%s4] sm:$0x1]
    %v43 = vlaneseq
    %v44 = vshrl.u32 %v43, 7
    %v45 = vsub.s32 0, %v44
    %v46 = vrot.slane %v41, %v45
    %v48 = vld [vmem:[%s5] sm:$0x1]
    %v50 = vlaneseq
    %v51 = vshrl.u32 %v50, 7
    %v52 = vsub.s32 0, %v51
    %v53 = vrot.slane %v48, %v52
    %v55 = vld [vmem:[#allocation2] sm:$0xff]
    %v56 = vld [vmem:[#allocation3] sm:$0xff]
    %v57 = vld [vmem:[%s0] sm:$0xff]
    %vm58 = vcmask 261120
    %v60 = vsel %vm58, %v55, 0
    %62 = vmatprep.subr.mxu0 0.0
    %63 = vmatpush1.msra.mxu0 %v37
    %64 = vmatprep.subr.mxu0 0.0
    %65 = vmatpush1.msra.mxu0 %v38
    %66 = vmatprep.subr.mxu0 0.0
    %67 = vmatpush1.msra.mxu0 %v39
    %68 = vmatprep.subr.mxu0 0.0
    %69 = vmatpush1.msra.mxu0 %v40
    %70 = vmatprep.subr.mxu0 0.0
    %71 = vmatpush1.msra.mxu0 0.0
    %72 = vmatprep.subr.mxu0 0.0
    %73 = vmatpush1.msra.mxu0 0.0
    %74 = vmatprep.subr.mxu0 0.0
    %75 = vmatpush1.msra.mxu0 0.0
    %76 = vmatprep.subr.mxu0 0.0
    %77 = vmatpush1.msra.mxu0 0.0
    %78 = vmatprep.subr.mxu0 0.0
    %79 = vmatpush1.msra.mxu0 0.0
    %80 = vmatprep.subr.mxu0 0.0
    %81 = vmatpush1.msra.mxu0 0.0
    %82 = vmatprep.subr.mxu0 0.0
    %83 = vmatpush1.msra.mxu0 0.0
    %84 = vmatprep.subr.mxu0 0.0
    %85 = vmatpush1.msra.mxu0 0.0
    %86 = vmatprep.subr.mxu0 0.0
    %87 = vmatpush1.msra.mxu0 0.0
    %88 = vmatprep.subr.mxu0 0.0
    %89 = vmatpush1.msra.mxu0 0.0
    %90 = vmatprep.subr.mxu0 0.0
    %91 = vmatpush1.msra.mxu0 0.0
    %92 = vmatprep.subr.mxu0 0.0
    %93 = vmatpush1.msra.mxu0 0.0
    %94 = vmatprep.subr.mxu0 0.0
    %95 = vmatpush1.msra.mxu0 0.0
    %96 = vmatprep.subr.mxu0 0.0
    %97 = vmatpush1.msra.mxu0 0.0
    %98 = vmatprep.subr.mxu0 0.0
    %99 = vmatpush1.msra.mxu0 0.0
    %100 = vmatprep.subr.mxu0 0.0
    %101 = vmatpush1.msra.mxu0 0.0
    %102 = vmatprep.subr.mxu0 0.0
    %103 = vmatpush1.msra.mxu0 0.0
    %104 = vmatprep.subr.mxu0 0.0
    %105 = vmatpush1.msra.mxu0 0.0
    %106 = vmatprep.subr.mxu0 0.0
    %107 = vmatpush1.msra.mxu0 0.0
    %108 = vmatprep.subr.mxu0 0.0
    %109 = vmatpush1.msra.mxu0 0.0
    %110 = vmatprep.subr.mxu0 0.0
    %111 = vmatpush1.msra.mxu0 0.0
    %112 = vmatprep.subr.mxu0 0.0
    %113 = vmatpush1.msra.mxu0 0.0
    %114 = vmatprep.subr.mxu0 0.0
    %115 = vmatpush1.msra.mxu0 0.0
    %116 = vmatprep.subr.mxu0 0.0
    %117 = vmatpush1.msra.mxu0 0.0
    %118 = vmatprep.subr.mxu0 0.0
    %119 = vmatpush1.msra.mxu0 0.0
    %120 = vmatprep.subr.mxu0 0.0
    %121 = vmatpush1.msra.mxu0 0.0
    %122 = vmatprep.subr.mxu0 0.0
    %123 = vmatpush1.msra.mxu0 0.0
    %124 = vmatprep.subr.mxu0 0.0
    %125 = vmatpush1.msra.mxu0 0.0
    %126 = vmatprep.mubr.f32.mxu0 0.0
    %127 = vmatmul.mubr.f32.gmra.mrb[0].mxu0 %v60
    %v128 = vpop.f32.mrb[0].mxu0
    %v129 = vadd.f32 0.0, %v128
    %v130 = vpop.f32.mrb[0].mxu0
    %131 = vdwg.mxu0
    %v132 = vadd.f32 %v57, %v129
    %v133 = vtanh.pop %v132
    %v134 = vmul.f32 %v46, %v133
    %v135 = vadd.f32 %v134, %v53
    %137 = vrot.lane.b32.xlu0 %v56, 32
    %v138 = vpop.permute.xlu0 %137
    %v140 = vmul.f32 %v135, %v138
    %142 = vrot.lane.b32.xlu0 %v135, 64
    %v143 = vpop.permute.xlu0 %142
    %v145 = vmul.f32 %v135, %v143
    %147 = vrot.lane.b32.xlu0 %v145, 32
    %v148 = vpop.permute.xlu0 %147
    %v150 = vadd.f32 %v140, %v148
    %v151 = vtanh.pop %v150
    %153 = vrot.lane.b32.xlu0 %v151, 64
    %v154 = vpop.permute.xlu0 %153
    %v156 = vmul.f32 %v135, %v154
    %158 = vrot.lane.b32.xlu0 %v156, 32
    %v159 = vpop.permute.xlu0 %158
    %161 = vst.msk [vmem:[#allocation4] sm:$0xff] %vm58, %v159
    %162 = vst.msk [vmem:[#allocation2] sm:$0xff] %vm58, %v159
    %164 = vrot.lane.b32.xlu0 %v150, 96
    %v165 = vpop.permute.xlu0 %164
    %167 = vst.msk [vmem:[#allocation3] sm:$0xff] %vm58, %v165
    // Predicated region
    $region30: #{_lstm_forward.1} parent=1 // pred_check
      %p168 = pneg %p28
    $region31: #{_lstm_forward.1} parent=1 // pred_check_branch
      %170 = sbr.rel (%p168) target = $region33
    $region32: #{_lstm_forward.1} parent=1 // pred_region
      %171 = vst.msk [vmem:[#allocation6] sm:$0xff] %vm58, %v159
      %172 = vst.msk [vmem:[#allocation8] sm:$0xff] %vm58, %v165
    $region33: #{_lstm_forward.1} parent=1 // pred_fallthru
      _
    // Predicated region
    $region34: #{_lstm_forward.1} parent=1 // pred_check
      _
    $region35: #{_lstm_forward.1} parent=1 // pred_check_branch
      %174 = sbr.rel (0) target = $region37
    $region36: #{_lstm_forward.1} parent=1 // pred_region
      %s176 = ssub.s32 128, 128
      %177 = vsyncadd [#allocation5], %s176
      %s179 = sshll.u32 [#allocation4], 4
      %s180 = int_to_ptr.vmem [resolvable:$true] %s179
      %182 = dma.vmem_to_hbm [thread:$0]  %s180, 128, %s6, [#allocation5]
    $region37: #{_lstm_forward.1} parent=1 // pred_fallthru
      _
    // Predicated region
    $region38: #{_lstm_forward.1} parent=1 // pred_check
      _
    $region39: #{_lstm_forward.1} parent=1 // pred_check_branch
      %184 = sbr.rel (0) target = $region41
    $region40: #{_lstm_forward.1} parent=1 // pred_region
      %s186 = ssub.s32 128, 128
      %187 = vsyncadd [#allocation7], %s186
      %s189 = sshll.u32 [#allocation6], 4
      %s190 = int_to_ptr.vmem [resolvable:$true] %s189
      %192 = dma.vmem_to_hbm [thread:$0]  %s190, 128, %s7, [#allocation7]
    $region41: #{_lstm_forward.1} parent=1 // pred_fallthru
      _
    // Predicated region
    $region42: #{_lstm_forward.1} parent=1 // pred_check
      _
    $region43: #{_lstm_forward.1} parent=1 // pred_check_branch
      %194 = sbr.rel (0) target = $region45
    $region44: #{_lstm_forward.1} parent=1 // pred_region
      %s196 = ssub.s32 128, 128
      %197 = vsyncadd [#allocation7], %s196
      %s199 = sshll.u32 [#allocation8], 4
      %s200 = int_to_ptr.vmem [resolvable:$true] %s199
      %202 = dma.vmem_to_hbm [thread:$0]  %s200, 128, %s8, [#allocation7]
    $region45: #{_lstm_forward.1} parent=1 // pred_fallthru
      _
    // Predicated region
    $region46: #{_lstm_forward.1} parent=1 // pred_check
      _
    $region47: #{_lstm_forward.1} parent=1 // pred_check_branch
      %204 = sbr.rel (0) target = $region49
    $region48: #{_lstm_forward.1} parent=1 // pred_region
      %205 = dma.done [#allocation5], 128
    $region49: #{_lstm_forward.1} parent=1 // pred_fallthru
      _
    // Predicated region
    $region50: #{_lstm_forward.1} parent=1 // pred_check
      _
    $region51: #{_lstm_forward.1} parent=1 // pred_check_branch
      %207 = sbr.rel (0) target = $region53
    $region52: #{_lstm_forward.1} parent=1 // pred_region
      %208 = dma.done [#allocation7], 128
    $region53: #{_lstm_forward.1} parent=1 // pred_fallthru
      _
    // Predicated region
    $region54: #{_lstm_forward.1} parent=1 // pred_check
      _
    $region55: #{_lstm_forward.1} parent=1 // pred_check_branch
      %210 = sbr.rel (0) target = $region57
    $region56: #{_lstm_forward.1} parent=1 // pred_region
      %211 = dma.done [#allocation7], 128
    $region57: #{_lstm_forward.1} parent=1 // pred_fallthru
      _
    %212 = vsyncpa [#allocation5], 1
    %213 = vsyncpa [#allocation7], 1

</llo_original>
